<compile_context>
chip_gen: v7x
topology: tpu7x:2x2x1
jax: 0.10.0
libtpu: 0.0.40
codegen_flags: <defaults>
</compile_context>

<pallas_src>
from functools import partial

import jax
import jax.numpy as jnp
from jax.experimental import pallas as pl
from jax.experimental.pallas import tpu as pltpu

_LANE = 128
_SUBLANE = 8


def _wce_kernel(logits_ref, targets_ref, wrow_ref, out_ref, *, batch, tb):
    """One batch tile: emit (num, den) partials into a lane-dense output row."""
    logits = logits_ref[...].astype(jnp.float32)     # (TB, C) upcast in-kernel
    targets = targets_ref[...]                       # (TB, 1) int32
    w_row = wrow_ref[...]                            # (TB, 1) f32 = weight[target]

    # valid-row mask for the (possibly out-of-bounds) batch tail; B is static,
    # so no scalar prefetch is needed. jnp.where blocks any garbage/NaN in the
    # tail rows from propagating into the partial sums.
    row_ids = (jax.lax.broadcasted_iota(jnp.int32, (tb, 1), 0)
               + pl.program_id(0) * tb)                               # (TB, 1)
    valid = row_ids < batch

    # numerically stable log-sum-exp over the class (lane) axis
    m = jnp.max(logits, axis=-1, keepdims=True)                       # (TB, 1)
    sumexp = jnp.sum(jnp.exp(logits - m), axis=-1, keepdims=True)     # (TB, 1)
    lse = m + jnp.log(sumexp)                                         # (TB, 1)

    # select-based gather of the target logit (no bool->f32, no one-hot temp)
    class_ids = jax.lax.broadcasted_iota(jnp.int32, logits.shape, 1)  # (TB, C)
    t_logit = jnp.sum(jnp.where(class_ids == targets, logits, 0.0),
                      axis=-1, keepdims=True)                         # (TB, 1)

    nll = lse - t_logit                                               # (TB, 1)
    num = jnp.sum(jnp.where(valid, w_row * nll, 0.0))  # weighted NLL partial
    den = jnp.sum(jnp.where(valid, w_row, 0.0))        # weight-sum partial

    # lane-dense write: lane 0 = num, lane 1 = den, rest zero
    lane = jax.lax.broadcasted_iota(jnp.int32, out_ref.shape, 2)      # (1,1,128)
    out_ref[...] = jnp.where(lane == 0, num, jnp.where(lane == 1, den, 0.0))


def _choose_batch_tile(batch, num_classes, itemsize):
    """Rows per tile, budgeting the full in-kernel working set (~16 MiB)."""
    # per row: double-buffered native-dtype ingest + ~3 f32 (TB,C) temporaries
    per_row = max(1, num_classes * (2 * itemsize + 12))
    budget = 16 * 1024 * 1024
    tb = max(1, budget // per_row)

    if batch < _SUBLANE:
        return batch                       # block dim == full array dim is legal

    tb = max(_SUBLANE, min(8192, (tb // _SUBLANE) * _SUBLANE))
    tb = min(tb, pl.cdiv(batch, _SUBLANE) * _SUBLANE)

    # v7x megacore: prefer >= 2 grid steps when the batch is large enough so
    # both TensorCores get a tile (harmless no-op on v5e/v6e: still 1 TC).
    if tb >= batch and batch >= 2 * _SUBLANE:
        tb = pl.cdiv(pl.cdiv(batch, 2), _SUBLANE) * _SUBLANE
    return tb


def weighted_cross_entropy_loss(logits, targets, class_weights=None):
    """logits: (B, C) f32/bf16, targets: (B,) int, class_weights: (C,) or None -> scalar f32."""
    B, C = logits.shape
    targets = targets.astype(jnp.int32)

    # gather per-example class weight in the wrapper: tiny (B,1) stream instead
    # of a resident (1, C) row + a per-element multiply/reduce in the kernel.
    if class_weights is None:
        w_row = jnp.ones((B, 1), jnp.float32)
    else:
        w_row = class_weights.astype(jnp.float32)[targets].reshape(B, 1)
    targets_2d = targets.reshape(B, 1)

    itemsize = jnp.dtype(logits.dtype).itemsize
    TB = _choose_batch_tile(B, C, itemsize)
    num_tiles = pl.cdiv(B, TB)

    cost = pl.CostEstimate(
        flops=5 * B * C,
        transcendentals=B * C,
        bytes_accessed=B * C * itemsize + B * 8 + num_tiles * _LANE * 4,
    )

    partials = pl.pallas_call(
        partial(_wce_kernel, batch=B, tb=TB),
        out_shape=jax.ShapeDtypeStruct((num_tiles, 1, _LANE), jnp.float32),
        grid=(num_tiles,),
        in_specs=[
            pl.BlockSpec((TB, C), lambda i: (i, 0)),   # logits tile (no class pad)
            pl.BlockSpec((TB, 1), lambda i: (i, 0)),   # targets
            pl.BlockSpec((TB, 1), lambda i: (i, 0)),   # gathered per-row weight
        ],
        out_specs=pl.BlockSpec((1, 1, _LANE), lambda i: (i, 0, 0)),
        compiler_params=pltpu.CompilerParams(
            dimension_semantics=("parallel",),
            vmem_limit_bytes=32 * 1024 * 1024,
        ),
        cost_estimate=cost,
    )(logits, targets_2d, w_row)

    num = jnp.sum(partials[:, 0, 0])
    den = jnp.sum(partials[:, 0, 1])
    # weighted mean; NaN if total gathered weight is 0 (matches F.cross_entropy).
    return num / den


def _reference(logits, targets, class_weights):
    # pure-JAX reference replicating F.cross_entropy(weight=..., reduction='mean')
    logp = jax.nn.log_softmax(logits.astype(jnp.float32), axis=-1)
    nll = -jnp.take_along_axis(logp, targets[:, None], axis=-1)[:, 0]
    w = class_weights[targets]
    return jnp.sum(w * nll) / jnp.sum(w)


if __name__ == "__main__":
    key = jax.random.PRNGKey(0)
    k_logits, k_targets, k_weights = jax.random.split(key, 3)

    B, C = 8, 32  # batch_size, num_classes (C deliberately not a 128-multiple)
    logits = jax.random.normal(k_logits, (B, C), dtype=jnp.float32)
    targets = jax.random.randint(k_targets, (B,), 0, C, dtype=jnp.int32)
    class_weights = jax.random.uniform(
        k_weights, (C,), dtype=jnp.float32, minval=0.5, maxval=2.0
    )

    ref = _reference(logits, targets, class_weights)

    # f32 ingest path
    loss = weighted_cross_entropy_loss(logits, targets, class_weights)
    loss = jax.block_until_ready(loss)
    assert jnp.allclose(loss, ref, rtol=1e-5, atol=1e-5), (loss, ref)

    # bf16 ingest path (only when the caller already produces bf16 logits)
    loss_bf16 = weighted_cross_entropy_loss(
        logits.astype(jnp.bfloat16), targets, class_weights
    )
    loss_bf16 = jax.block_until_ready(loss_bf16)
    assert jnp.allclose(loss_bf16, ref, rtol=2e-2, atol=2e-2), (loss_bf16, ref)

    # unweighted path (weight=None, as in the nn.Module default)
    loss_unw = weighted_cross_entropy_loss(logits, targets, None)
    loss_unw = jax.block_until_ready(loss_unw)
    ref_unw = _reference(logits, targets, jnp.ones((C,), jnp.float32))
    assert jnp.allclose(loss_unw, ref_unw, rtol=1e-5, atol=1e-5), (loss_unw, ref_unw)

    print("KERNEL_OK")
</pallas_src>

<mosaic_0001>
module attributes {stable_mosaic.version = 11 : i64} {
  func.func @_wce_kernel(%arg0: i32, %arg1: memref<8x32xf32, #tpu.memory_space<vmem>>, %arg2: memref<8x1xi32, #tpu.memory_space<vmem>>, %arg3: memref<8x1xf32, #tpu.memory_space<vmem>>, %arg4: memref<1x1x128xf32, #tpu.memory_space<vmem>>) attributes {dimension_semantics = [#tpu.dimension_semantics<parallel>], iteration_bounds = array<i64: 1>, scalar_prefetch = 0 : i64, scratch_operands = 0 : i64, tpu.core_type = #tpu.core_type<tc>, window_params = [{transform_indices = @transform_0, window_bounds = array<i64: 8, 32>}, {transform_indices = @transform_1, window_bounds = array<i64: 8, 1>}, {transform_indices = @transform_2, window_bounds = array<i64: 8, 1>}, {transform_indices = @transform_3, window_bounds = array<i64: 1, 1, 128>}]} {
    %c0 = arith.constant 0 : index
    %c0_0 = arith.constant 0 : index
    %0 = vector.load %arg1[%c0, %c0_0] : memref<8x32xf32, #tpu.memory_space<vmem>>, vector<8x32xf32>
    %c0_1 = arith.constant 0 : index
    %c0_2 = arith.constant 0 : index
    %1 = vector.load %arg2[%c0_1, %c0_2] : memref<8x1xi32, #tpu.memory_space<vmem>>, vector<8x1xi32>
    %c0_3 = arith.constant 0 : index
    %c0_4 = arith.constant 0 : index
    %2 = vector.load %arg3[%c0_3, %c0_4] : memref<8x1xf32, #tpu.memory_space<vmem>>, vector<8x1xf32>
    %3 = tpu.iota {dimensions = array<i32: 0>} : vector<8x1xi32>
    %c8_i32 = arith.constant 8 : i32
    %4 = arith.muli %arg0, %c8_i32 : i32
    %5 = vector.broadcast %4 : i32 to vector<8x1xi32>
    %6 = arith.addi %3, %5 : vector<8x1xi32>
    %c8_i32_5 = arith.constant 8 : i32
    %7 = vector.broadcast %c8_i32_5 : i32 to vector<8x1xi32>
    %8 = arith.cmpi slt, %6, %7 : vector<8x1xi32>
    %cst = arith.constant dense<0xFF800000> : vector<8xf32>
    %9 = vector.multi_reduction <maximumf>, %0, %cst [1] : vector<8x32xf32> to vector<8xf32>
    %10 = vector.shape_cast %9 : vector<8xf32> to vector<8x1xf32>
    %11 = vector.broadcast %10 : vector<8x1xf32> to vector<8x32xf32>
    %12 = arith.subf %0, %11 : vector<8x32xf32>
    %13 = math.exp %12 : vector<8x32xf32>
    %cst_6 = arith.constant dense<0.000000e+00> : vector<8xf32>
    %14 = vector.multi_reduction <add>, %13, %cst_6 [1] : vector<8x32xf32> to vector<8xf32>
    %15 = vector.shape_cast %14 : vector<8xf32> to vector<8x1xf32>
    %16 = math.log %15 : vector<8x1xf32>
    %17 = arith.addf %10, %16 : vector<8x1xf32>
    %18 = tpu.iota {dimensions = array<i32: 1>} : vector<8x32xi32>
    %19 = vector.broadcast %1 : vector<8x1xi32> to vector<8x32xi32>
    %20 = arith.cmpi eq, %18, %19 : vector<8x32xi32>
    %cst_7 = arith.constant 0.000000e+00 : f32
    %21 = vector.broadcast %cst_7 : f32 to vector<8x32xf32>
    %22 = arith.select %20, %0, %21 : vector<8x32xi1>, vector<8x32xf32>
    %cst_8 = arith.constant dense<0.000000e+00> : vector<8xf32>
    %23 = vector.multi_reduction <add>, %22, %cst_8 [1] : vector<8x32xf32> to vector<8xf32>
    %24 = vector.shape_cast %23 : vector<8xf32> to vector<8x1xf32>
    %25 = arith.subf %17, %24 : vector<8x1xf32>
    %26 = arith.mulf %2, %25 : vector<8x1xf32>
    %cst_9 = arith.constant 0.000000e+00 : f32
    %27 = vector.broadcast %cst_9 : f32 to vector<8x1xf32>
    %28 = arith.select %8, %26, %27 : vector<8x1xi1>, vector<8x1xf32>
    %29 = vector.shape_cast %28 : vector<8x1xf32> to vector<1x8x1xf32>
    %cst_10 = arith.constant dense<0.000000e+00> : vector<1xf32>
    %30 = vector.multi_reduction <add>, %29, %cst_10 [1, 2] : vector<1x8x1xf32> to vector<1xf32>
    %31 = vector.shape_cast %30 : vector<1xf32> to vector<1x1x1xf32>
    %32 = vector.extract %31[0, 0, 0] : f32 from vector<1x1x1xf32>
    %cst_11 = arith.constant 0.000000e+00 : f32
    %33 = vector.broadcast %cst_11 : f32 to vector<8x1xf32>
    %34 = arith.select %8, %2, %33 : vector<8x1xi1>, vector<8x1xf32>
    %35 = vector.shape_cast %34 : vector<8x1xf32> to vector<1x8x1xf32>
    %cst_12 = arith.constant dense<0.000000e+00> : vector<1xf32>
    %36 = vector.multi_reduction <add>, %35, %cst_12 [1, 2] : vector<1x8x1xf32> to vector<1xf32>
    %37 = vector.shape_cast %36 : vector<1xf32> to vector<1x1x1xf32>
    %38 = vector.extract %37[0, 0, 0] : f32 from vector<1x1x1xf32>
    %39 = tpu.iota {dimensions = array<i32: 2>} : vector<1x1x128xi32>
    %c0_i32 = arith.constant 0 : i32
    %40 = vector.broadcast %c0_i32 : i32 to vector<1x1x128xi32>
    %41 = arith.cmpi eq, %39, %40 : vector<1x1x128xi32>
    %c1_i32 = arith.constant 1 : i32
    %42 = vector.broadcast %c1_i32 : i32 to vector<1x1x128xi32>
    %43 = arith.cmpi eq, %39, %42 : vector<1x1x128xi32>
    %cst_13 = arith.constant 0.000000e+00 : f32
    %44 = vector.broadcast %38 : f32 to vector<1x1x128xf32>
    %45 = vector.broadcast %cst_13 : f32 to vector<1x1x128xf32>
    %46 = arith.select %43, %44, %45 : vector<1x1x128xi1>, vector<1x1x128xf32>
    %47 = vector.broadcast %32 : f32 to vector<1x1x128xf32>
    %48 = arith.select %41, %47, %46 : vector<1x1x128xi1>, vector<1x1x128xf32>
    %c0_14 = arith.constant 0 : index
    %c0_15 = arith.constant 0 : index
    %c0_16 = arith.constant 0 : index
    %49 = vector.load %arg4[%c0_14, %c0_15, %c0_16] : memref<1x1x128xf32, #tpu.memory_space<vmem>>, vector<1x1x128xf32>
    tpu.vector_store %arg4[%c0_14, %c0_15, %c0_16], %48 {strides = array<i32>} : memref<1x1x128xf32, #tpu.memory_space<vmem>>, vector<1x1x128xf32>,
    return
  }
  func.func @transform_0(%arg0: i32) -> (i32, i32) {
    %c0_i32 = arith.constant 0 : i32
    %c0_i32_0 = arith.constant 0 : i32
    return %arg0, %c0_i32 : i32, i32
  }
  func.func @transform_1(%arg0: i32) -> (i32, i32) {
    %c0_i32 = arith.constant 0 : i32
    %c0_i32_0 = arith.constant 0 : i32
    return %arg0, %c0_i32 : i32, i32
  }
  func.func @transform_2(%arg0: i32) -> (i32, i32) {
    %c0_i32 = arith.constant 0 : i32
    %c0_i32_0 = arith.constant 0 : i32
    return %arg0, %c0_i32 : i32, i32
  }
  func.func @transform_3(%arg0: i32) -> (i32, i32, i32) {
    %c0_i32 = arith.constant 0 : i32
    %c0_i32_0 = arith.constant 0 : i32
    %c0_i32_1 = arith.constant 0 : i32
    return %arg0, %c0_i32, %c0_i32_0 : i32, i32, i32
  }
}

</mosaic_0001>

<llo_original>
// kernel: tpu_custom_call.1
$region0: #{tpu_custom_call.1}
  #allocation0 [shape = 'u32[]', space=smem, size = 0x4, offset = 0x4, fixed_abs, tag = 'smem constant byte address 0x4 - core index']
  #allocation1 [shape = 'u32[144,128]{1,0:T(1,128)}', space=vmem, size = 0x12000, scoped, tag = 'internal scratch']
  %s0 = inlined_call_operand.vmem [shape: f32[8,32], index: 0, kind: input, shape index: {}]
  %s1 = inlined_call_operand.vmem [shape: s32[8,1], index: 1, kind: input, shape index: {}]
  %s2 = inlined_call_operand.vmem [shape: f32[8,1], index: 2, kind: input, shape index: {}]
  %s3 = inlined_call_operand.hbm [shape: f32[1,1,128], index: 3, kind: output, shape index: {}]
  %s4 = sld [smem:[#allocation0]]
  $region22: #{tpu_custom_call.1} parent=0
    _
  %s6 = ssub.s32 1, %s4
  %s7 = scalar_select 0, %s6, %s4
  $region1: #{tpu_custom_call.1} parent=0
    #allocation2 [shape = 'u8[512]{0}', space=vmem, size = 0x400, scoped, tag = 'output window, operand 0, single buffered']
    #allocation3 [shape = 's32[1]{0}', space=sflag, size = 0x4, scoped, tag = 'scoped memory for tpu_custom_call.1']
    %8 = vsyncpa [#allocation3], 0
    // Predicated region
    $region2: #{tpu_custom_call.1} parent=1 // pred_check
      _
    $region3: #{tpu_custom_call.1} parent=1 // pred_check_branch
      %10 = sbr.rel (0) target = $region5
    $region4: #{tpu_custom_call.1} parent=1 // pred_region
      _
    $region5: #{tpu_custom_call.1} parent=1 // pred_fallthru
      _
    // Predicated region
    $region6: #{tpu_custom_call.1} parent=1 // pred_check
      _
    $region7: #{tpu_custom_call.1} parent=1 // pred_check_branch
      %12 = sbr.rel (0) target = $region9
    $region8: #{tpu_custom_call.1} parent=1 // pred_region
      _
    $region9: #{tpu_custom_call.1} parent=1 // pred_fallthru
      _
    // Predicated region
    $region10: #{tpu_custom_call.1} parent=1 // pred_check
      _
    $region11: #{tpu_custom_call.1} parent=1 // pred_check_branch
      %14 = sbr.rel (0) target = $region13
    $region12: #{tpu_custom_call.1} parent=1 // pred_region
      _
    $region13: #{tpu_custom_call.1} parent=1 // pred_fallthru
      _
    %v15 = vld [vmem:[%s0] sm:$0xff]
    %v16 = vld [vmem:[%s1] sm:$0xff]
    %v17 = vld [vmem:[%s2] sm:$0xff]
    %v18 = vlaneseq
    %v19 = vshrl.u32 %v18, 7
    %s20 = smul.u32 0, 8
    %v21 = vstv %s20
    %v22 = vadd.s32 %v19, %v21
    %vm23 = vcmp.lt.s32.totalorder %v22, 8
    %vm24 = vcmask 261120
    %v25 = vsel %vm24, %v15, -inf
    %26 = vmax.xlane.f32.xlu0 %v25
    %v27 = vpop.xlane.xlu0 %26
    %v28 = vsub.f32 %v15, %v27
    %v29 = vmul.f32 %v28, 1.442695
    %v30 = vpow.pop %v29
    %v31 = vsel %vm24, %v30, 0.0
    %32 = vadd.xlane.f32.xlu0 %v31
    %v33 = vpop.xlane.xlu0 %32
    %v34 = vlog2.pop %v33
    %v35 = vmul.f32 %v34, 0.6931472
    %v36 = vadd.f32 %v27, %v35
    %v37 = vlaneseq
    %v38 = vand.u32 %v37, 127
    %39 = vset.pattern.permute.xlu0 0
    %40 = vperm.xlu0 %39, %v16
    %v41 = vpop.permute.xlu0 %40
    %vm42 = vcmp.eq.s32.totalorder %v38, %v41
    %v43 = vsel %vm42, %v15, 0.0
    %v44 = vsel %vm24, %v43, 0.0
    %45 = vadd.xlane.f32.xlu0 %v44
    %v46 = vpop.xlane.xlu0 %45
    %v47 = vsub.f32 %v36, %v46
    %v48 = vmul.f32 %v17, %v47
    %v49 = vsel %vm23, %v48, 0.0
    %vm50 = vcmask 7168
    %v51 = vsel %vm50, %v49, 0.0
    %52 = vadd.xlane.f32.xlu0 %v51
    %v53 = vpop.xlane.xlu0 %52
    %v54 = vrot.slane %v53, 4
    %v55 = vadd.f32 %v53, %v54
    %v56 = vrot.slane %v55, 2
    %v57 = vadd.f32 %v55, %v56
    %v58 = vrot.slane %v57, 1
    %v59 = vadd.f32 %v57, %v58
    %s60 = vtos %v59
    %v61 = vsel %vm23, %v17, 0.0
    %v62 = vsel %vm50, %v61, 0.0
    %63 = vadd.xlane.f32.xlu0 %v62
    %v64 = vpop.xlane.xlu0 %63
    %v65 = vrot.slane %v64, 4
    %v66 = vadd.f32 %v64, %v65
    %v67 = vrot.slane %v66, 2
    %v68 = vadd.f32 %v66, %v67
    %v69 = vrot.slane %v68, 1
    %v70 = vadd.f32 %v68, %v69
    %s71 = vtos %v70
    %vm72 = vcmp.eq.s32.totalorder %v38, 0
    %vm73 = vcmp.eq.s32.totalorder %v38, 1
    %v74 = vstv %s71
    %v75 = vsel %vm73, %v74, 0.0
    %v76 = vstv %s60
    %v77 = vsel %vm72, %v76, %v75
    %78 = vst [vmem:[#allocation2] sm:$0x1] %v77
    // Predicated region
    $region14: #{tpu_custom_call.1} parent=1 // pred_check
      _
    $region15: #{tpu_custom_call.1} parent=1 // pred_check_branch
      %80 = sbr.rel (0) target = $region17
    $region16: #{tpu_custom_call.1} parent=1 // pred_region
      %s82 = ssub.s32 16, 16
      %83 = vsyncadd [#allocation3], %s82
      %s85 = sshll.u32 [#allocation2], 4
      %s86 = int_to_ptr.vmem [resolvable:$true] %s85
      %88 = dma.vmem_to_hbm [thread:$0]  %s86, 16, %s3, [#allocation3]
    $region17: #{tpu_custom_call.1} parent=1 // pred_fallthru
      _
    // Predicated region
    $region18: #{tpu_custom_call.1} parent=1 // pred_check
      _
    $region19: #{tpu_custom_call.1} parent=1 // pred_check_branch
      %90 = sbr.rel (0) target = $region21
    $region20: #{tpu_custom_call.1} parent=1 // pred_region
      %91 = dma.done [#allocation3], 16
    $region21: #{tpu_custom_call.1} parent=1 // pred_fallthru
      _
    %92 = vsyncpa [#allocation3], 1

</llo_original>
